<compile_context>
chip_gen: v5e
topology: v5e:2x2
jax: 0.10.0
libtpu: 0.0.40
codegen_flags: <defaults>
</compile_context>

<pallas_src>
import jax
import jax.numpy as jnp
from jax.experimental import pallas as pl
from jax.experimental.pallas import tpu as pltpu


_VMEM_BUDGET = 24 << 20      # target footprint: pipeline buffers + f32 temps
_VMEM_LIMIT = 48 << 20       # scoped limit; fits v5e/v6e (128 MiB) and v7x (64 MiB)
_MAX_LANE_TILE = 65536       # lane-tile cap (was 32768)


def _pick_lane_tile(hw, per_lane_bytes, other_parallel_blocks):
    """Lane (last-dim) tile: multiple of 128, sized to the VMEM budget, never
    larger than hw.  Shrinks so the parallel grid has >= 2 blocks when possible
    (v7x has 2 TensorCores that only split parallel grid axes)."""
    if hw <= 128:
        return hw                                   # full dim -> exempt from 128 rule
    t = _VMEM_BUDGET // max(per_lane_bytes, 1)
    t = min(t, _MAX_LANE_TILE, (hw // 128) * 128)
    t = max(128, (t // 128) * 128)
    while other_parallel_blocks * pl.cdiv(hw, t) < 2 and t > 128:
        t = max(128, ((t // 2) // 128) * 128)
    return t


# ----------------------------------------------------------------------------
# Kernels
# ----------------------------------------------------------------------------
def _identity_kernel(res_ref, pt_ref, out_ref):
    # in_channels == out_channels: residual add in native dtype (like torch).
    out_ref[...] = res_ref[...] + pt_ref[...]


def _make_conv_kernel(in_c, conv_c, expand):
    """1x1 conv (+ optional channel concat) + residual add, channels-on-sublanes."""

    def kernel(res_ref, pt_ref, w_ref, b_ref, out_ref):
        # res: (out_c, T)  pt: (in_c, T)  w: (conv_c, in_c)  b: (conv_c, 1)
        pt = pt_ref[...]                              # native dtype
        ptf = pt.astype(jnp.float32)
        w = w_ref[...].astype(jnp.float32)
        b = b_ref[...].astype(jnp.float32)

        # Tiny-channel pointwise conv on the VPU: unrolled broadcast-MACs,
        # f32 accumulation.  conv[o, s] = sum_i w[o, i] * pt[i, s] + b[o]
        acc = b + w[:, 0:1] * ptf[0:1, :]             # (conv_c,1)*(1,T)->(conv_c,T)
        for i in range(1, in_c):
            acc = acc + w[:, i:i + 1] * ptf[i:i + 1, :]
        conv = acc.astype(out_ref.dtype)

        if expand:
            # Residual add in native dtype; pass-through half has no f32 trip.
            # Two sliced stores (masked vst at sublane offset in_c) -- cheap vs
            # the HBM roofline and a known-good lowering.
            out_ref[:in_c, :] = res_ref[:in_c, :] + pt
            out_ref[in_c:, :] = res_ref[in_c:, :] + conv
        else:
            out_ref[...] = res_ref[...] + conv

    return kernel


# ----------------------------------------------------------------------------
# Wrapper
# ----------------------------------------------------------------------------
def residual_connect(residual, passed_thru, weight=None, bias=None):
    """residual: (B, out_c, H, W), passed_thru: (B, in_c, H, W) -- NCHW like PyTorch.

    weight (required when in_c != out_c): (in_c, conv_c) where
    conv_c = out_c - in_c (expand) or out_c (project); bias: (conv_c,).
    This matches a PyTorch 1x1-conv weight of shape (conv_c, in_c, 1, 1)
    transposed to (in_c, conv_c).
    """
    B, out_c, H, W = residual.shape
    Bp, in_c, Hp, Wp = passed_thru.shape
    assert (B, H, W) == (Bp, Hp, Wp), "residual / passed_thru spatial/batch mismatch"
    hw = H * W
    dtype = residual.dtype
    itemsize = jnp.dtype(dtype).itemsize

    cparams = pltpu.CompilerParams(
        dimension_semantics=("parallel", "parallel"),
        vmem_limit_bytes=_VMEM_LIMIT,
    )

    # ---------------- identity branch: channel-agnostic flattened view -------
    if in_c == out_c:
        R = B * out_c
        res2 = residual.reshape(R, hw)          # free reshape (contiguous collapse)
        pt2 = passed_thru.reshape(R, hw)

        # Row tile: full R unless that would blow the budget at 128 lanes.
        if 3 * R * itemsize * 2 * 128 <= _VMEM_BUDGET:
            row_tile = R
        else:
            row_tile = (_VMEM_BUDGET // (3 * itemsize * 2 * 128) // 8) * 8
            row_tile = max(8, min(R, row_tile))
        n_r = pl.cdiv(R, row_tile)

        per_lane = 3 * row_tile * itemsize * 2          # res + pt + out, double-buffered
        lane_tile = _pick_lane_tile(hw, per_lane, n_r)
        n_s = pl.cdiv(hw, lane_tile)

        spec = pl.BlockSpec((row_tile, lane_tile), lambda r, s: (r, s))
        out_v = pl.pallas_call(
            _identity_kernel,
            out_shape=jax.ShapeDtypeStruct((R, hw), dtype),
            grid_spec=pltpu.PrefetchScalarGridSpec(
                num_scalar_prefetch=0,
                grid=(n_r, n_s),
                in_specs=[spec, spec],
                out_specs=spec,
            ),
            compiler_params=cparams,
        )(res2, pt2)
        return out_v.reshape(B, out_c, H, W)

    # ---------------- conv branches: channels on sublanes, spatial on lanes --
    conv_c = (out_c - in_c) if in_c < out_c else out_c
    assert weight is not None, "weight required when in_channels != out_channels"
    weight = jnp.asarray(weight)
    assert weight.shape == (in_c, conv_c), (
        f"weight must be (in_c, conv_c)=({in_c}, {conv_c}), got {weight.shape}")
    if bias is None:
        bias = jnp.zeros((conv_c,), jnp.float32)
    bias = jnp.asarray(bias)
    assert bias.shape == (conv_c,), f"bias must be ({conv_c},), got {bias.shape}"

    res_v = residual.reshape(B, out_c, hw)      # free reshapes, no NCHW transpose
    pt_v = passed_thru.reshape(B, in_c, hw)
    w_t = weight.T                               # (conv_c, in_c): one column per in-chan
    b_col = bias.reshape(conv_c, 1)

    # VMEM budget per lane of tile: double-buffered pipeline buffers plus the
    # in-kernel f32 temporaries (pt upcast + conv accumulator) and cast/stage.
    per_lane = (2 * (2 * out_c + in_c) * itemsize     # res + out + pt, x2 buffers
                + (in_c + 2 * conv_c) * 4             # f32 pt copy + f32 accumulator
                + out_c * itemsize)                   # casts / staging slack
    lane_tile = _pick_lane_tile(hw, per_lane, B)
    n_s = pl.cdiv(hw, lane_tile)

    res_spec = pl.BlockSpec((None, out_c, lane_tile), lambda b, s: (b, 0, s))
    pt_spec = pl.BlockSpec((None, in_c, lane_tile), lambda b, s: (b, 0, s))
    w_spec = pl.BlockSpec((conv_c, in_c), lambda b, s: (0, 0))
    b_spec = pl.BlockSpec((conv_c, 1), lambda b, s: (0, 0))

    kernel = _make_conv_kernel(in_c, conv_c, expand=(in_c < out_c))
    out_v = pl.pallas_call(
        kernel,
        out_shape=jax.ShapeDtypeStruct((B, out_c, hw), dtype),
        grid_spec=pltpu.PrefetchScalarGridSpec(
            num_scalar_prefetch=0,
            grid=(B, n_s),
            in_specs=[res_spec, pt_spec, w_spec, b_spec],
            out_specs=res_spec,
        ),
        compiler_params=cparams,
    )(res_v, pt_v, w_t, b_col)
    return out_v.reshape(B, out_c, H, W)


# ----------------------------------------------------------------------------
# Reference (plain JAX) for verification
# ----------------------------------------------------------------------------
def residual_connect_ref(residual, passed_thru, weight=None, bias=None):
    out_c = residual.shape[1]
    in_c = passed_thru.shape[1]
    if in_c == out_c:
        return residual + passed_thru
    conv = jnp.einsum("bihw,io->bohw", passed_thru, weight) + bias[None, :, None, None]
    if in_c < out_c:
        return residual + jnp.concatenate([passed_thru, conv], axis=1)
    return residual + conv


# ----------------------------------------------------------------------------
# Demo
# ----------------------------------------------------------------------------
if __name__ == "__main__":
    key = jax.random.PRNGKey(0)
    B, H, W = 2, 16, 16
    k1, k2, k3, k4, k5, k6 = jax.random.split(key, 6)

    # ---- case: in_channels (4) < out_channels (8) -> concat branch ----
    in_c, out_c = 4, 8
    extra_c = out_c - in_c
    residual = jax.random.normal(k1, (B, out_c, H, W), jnp.float32)
    passed_thru = jax.random.normal(k2, (B, in_c, H, W), jnp.float32)
    w_expand = jax.random.normal(k3, (in_c, extra_c), jnp.float32) * 0.1
    b_expand = jax.random.normal(k4, (extra_c,), jnp.float32) * 0.1

    out = jax.block_until_ready(
        residual_connect(residual, passed_thru, w_expand, b_expand))
    ref = residual_connect_ref(residual, passed_thru, w_expand, b_expand)
    assert out.shape == ref.shape == (B, out_c, H, W)
    assert float(jnp.max(jnp.abs(out - ref))) < 1e-4

    # ---- case: in_channels == out_channels -> identity branch ----
    residual_eq = jax.random.normal(k5, (B, in_c, H, W), jnp.float32)
    out_eq = jax.block_until_ready(residual_connect(residual_eq, passed_thru))
    ref_eq = residual_connect_ref(residual_eq, passed_thru)
    assert float(jnp.max(jnp.abs(out_eq - ref_eq))) < 1e-5

    # ---- case: in_channels (8) > out_channels (4) -> projection branch ----
    pt_big = jax.random.normal(k6, (B, 8, H, W), jnp.float32)      # in_c = 8
    res_small = residual_eq                                        # out_c = 4
    w_proj = jax.random.normal(k3, (8, 4), jnp.float32) * 0.1      # (in_c, out_c)
    b_proj = jax.random.normal(k4, (4,), jnp.float32) * 0.1
    out_pr = jax.block_until_ready(
        residual_connect(res_small, pt_big, w_proj, b_proj))
    ref_pr = residual_connect_ref(res_small, pt_big, w_proj, b_proj)
    assert float(jnp.max(jnp.abs(out_pr - ref_pr))) < 1e-4

    # ---- case: small spatial extent (< 128 lanes) -> full-dim block ----
    H2, W2 = 5, 7
    res_odd = jax.random.normal(k1, (B, out_c, H2, W2), jnp.float32)
    pt_odd = jax.random.normal(k2, (B, in_c, H2, W2), jnp.float32)
    out_odd = jax.block_until_ready(
        residual_connect(res_odd, pt_odd, w_expand, b_expand))
    ref_odd = residual_connect_ref(res_odd, pt_odd, w_expand, b_expand)
    assert float(jnp.max(jnp.abs(out_odd - ref_odd))) < 1e-4

    # ---- case: spatial extent > 128 and not tile-aligned -> masked edge block ----
    H3, W3 = 12, 20                                   # hw = 240 -> tiles of 128 + partial
    res_edge = jax.random.normal(k5, (B, out_c, H3, W3), jnp.float32)
    pt_edge = jax.random.normal(k6, (B, in_c, H3, W3), jnp.float32)
    out_edge = jax.block_until_ready(
        residual_connect(res_edge, pt_edge, w_expand, b_expand))
    ref_edge = residual_connect_ref(res_edge, pt_edge, w_expand, b_expand)
    assert float(jnp.max(jnp.abs(out_edge - ref_edge))) < 1e-4

    print("KERNEL_OK")
</pallas_src>

<mosaic_0001>
module attributes {stable_mosaic.version = 11 : i64} {
  func.func @kernel(%arg0: i32, %arg1: i32, %arg2: memref<1x8x256xf32, #tpu.memory_space<vmem>>, %arg3: memref<1x4x256xf32, #tpu.memory_space<vmem>>, %arg4: memref<4x4xf32, #tpu.memory_space<vmem>>, %arg5: memref<4x1xf32, #tpu.memory_space<vmem>>, %arg6: memref<1x8x256xf32, #tpu.memory_space<vmem>>) attributes {dimension_semantics = [#tpu.dimension_semantics<parallel>, #tpu.dimension_semantics<parallel>], iteration_bounds = array<i64: 2, 1>, scalar_prefetch = 0 : i64, scratch_operands = 0 : i64, tpu.core_type = #tpu.core_type<tc>, window_params = [{transform_indices = @transform_0, window_bounds = array<i64: 1, 8, 256>}, {transform_indices = @transform_1, window_bounds = array<i64: 1, 4, 256>}, {pipeline_mode = #tpu.pipeline_mode<synchronous>, transform_indices = @transform_2, window_bounds = array<i64: 4, 4>}, {pipeline_mode = #tpu.pipeline_mode<synchronous>, transform_indices = @transform_3, window_bounds = array<i64: 4, 1>}, {transform_indices = @transform_4, window_bounds = array<i64: 1, 8, 256>}]} {
    %c0 = arith.constant 0 : index
    %c0_0 = arith.constant 0 : index
    %c0_1 = arith.constant 0 : index
    %0 = vector.load %arg3[%c0, %c0_0, %c0_1] : memref<1x4x256xf32, #tpu.memory_space<vmem>>, vector<1x4x256xf32>
    %1 = vector.shape_cast %0 : vector<1x4x256xf32> to vector<4x256xf32>
    %c0_2 = arith.constant 0 : index
    %c0_3 = arith.constant 0 : index
    %2 = vector.load %arg4[%c0_2, %c0_3] : memref<4x4xf32, #tpu.memory_space<vmem>>, vector<4x4xf32>
    %c0_4 = arith.constant 0 : index
    %c0_5 = arith.constant 0 : index
    %3 = vector.load %arg5[%c0_4, %c0_5] : memref<4x1xf32, #tpu.memory_space<vmem>>, vector<4x1xf32>
    %4 = vector.extract_strided_slice %2 {offsets = [0, 0], sizes = [4, 1], strides = [1, 1]} : vector<4x4xf32> to vector<4x1xf32>
    %5 = vector.extract_strided_slice %1 {offsets = [0, 0], sizes = [1, 256], strides = [1, 1]} : vector<4x256xf32> to vector<1x256xf32>
    %6 = vector.broadcast %4 : vector<4x1xf32> to vector<4x256xf32>
    %7 = vector.broadcast %5 : vector<1x256xf32> to vector<4x256xf32>
    %8 = arith.mulf %6, %7 : vector<4x256xf32>
    %9 = vector.broadcast %3 : vector<4x1xf32> to vector<4x256xf32>
    %10 = arith.addf %9, %8 : vector<4x256xf32>
    %11 = vector.extract_strided_slice %2 {offsets = [0, 1], sizes = [4, 1], strides = [1, 1]} : vector<4x4xf32> to vector<4x1xf32>
    %12 = vector.extract_strided_slice %1 {offsets = [1, 0], sizes = [1, 256], strides = [1, 1]} : vector<4x256xf32> to vector<1x256xf32>
    %13 = vector.broadcast %11 : vector<4x1xf32> to vector<4x256xf32>
    %14 = vector.broadcast %12 : vector<1x256xf32> to vector<4x256xf32>
    %15 = arith.mulf %13, %14 : vector<4x256xf32>
    %16 = arith.addf %10, %15 : vector<4x256xf32>
    %17 = vector.extract_strided_slice %2 {offsets = [0, 2], sizes = [4, 1], strides = [1, 1]} : vector<4x4xf32> to vector<4x1xf32>
    %18 = vector.extract_strided_slice %1 {offsets = [2, 0], sizes = [1, 256], strides = [1, 1]} : vector<4x256xf32> to vector<1x256xf32>
    %19 = vector.broadcast %17 : vector<4x1xf32> to vector<4x256xf32>
    %20 = vector.broadcast %18 : vector<1x256xf32> to vector<4x256xf32>
    %21 = arith.mulf %19, %20 : vector<4x256xf32>
    %22 = arith.addf %16, %21 : vector<4x256xf32>
    %23 = vector.extract_strided_slice %2 {offsets = [0, 3], sizes = [4, 1], strides = [1, 1]} : vector<4x4xf32> to vector<4x1xf32>
    %24 = vector.extract_strided_slice %1 {offsets = [3, 0], sizes = [1, 256], strides = [1, 1]} : vector<4x256xf32> to vector<1x256xf32>
    %25 = vector.broadcast %23 : vector<4x1xf32> to vector<4x256xf32>
    %26 = vector.broadcast %24 : vector<1x256xf32> to vector<4x256xf32>
    %27 = arith.mulf %25, %26 : vector<4x256xf32>
    %28 = arith.addf %22, %27 : vector<4x256xf32>
    %c0_6 = arith.constant 0 : index
    %c0_7 = arith.constant 0 : index
    %c0_8 = arith.constant 0 : index
    %29 = vector.load %arg2[%c0_6, %c0_7, %c0_8] : memref<1x8x256xf32, #tpu.memory_space<vmem>>, vector<1x4x256xf32>
    %30 = vector.shape_cast %29 : vector<1x4x256xf32> to vector<4x256xf32>
    %31 = arith.addf %30, %1 : vector<4x256xf32>
    %c0_9 = arith.constant 0 : index
    %c0_10 = arith.constant 0 : index
    %c0_11 = arith.constant 0 : index
    %32 = vector.load %arg6[%c0_9, %c0_10, %c0_11] : memref<1x8x256xf32, #tpu.memory_space<vmem>>, vector<1x4x256xf32>
    %33 = vector.shape_cast %32 : vector<1x4x256xf32> to vector<4x256xf32>
    %34 = vector.shape_cast %31 : vector<4x256xf32> to vector<1x4x256xf32>
    tpu.vector_store %arg6[%c0_9, %c0_10, %c0_11], %34 {strides = array<i32>} : memref<1x8x256xf32, #tpu.memory_space<vmem>>, vector<1x4x256xf32>,
    %c0_12 = arith.constant 0 : index
    %c4 = arith.constant 4 : index
    %c0_13 = arith.constant 0 : index
    %35 = vector.load %arg2[%c0_12, %c4, %c0_13] : memref<1x8x256xf32, #tpu.memory_space<vmem>>, vector<1x4x256xf32>
    %36 = vector.shape_cast %35 : vector<1x4x256xf32> to vector<4x256xf32>
    %37 = arith.addf %36, %28 : vector<4x256xf32>
    %c0_14 = arith.constant 0 : index
    %c4_15 = arith.constant 4 : index
    %c0_16 = arith.constant 0 : index
    %38 = vector.load %arg6[%c0_14, %c4_15, %c0_16] : memref<1x8x256xf32, #tpu.memory_space<vmem>>, vector<1x4x256xf32>
    %39 = vector.shape_cast %38 : vector<1x4x256xf32> to vector<4x256xf32>
    %40 = vector.shape_cast %37 : vector<4x256xf32> to vector<1x4x256xf32>
    tpu.vector_store %arg6[%c0_14, %c4_15, %c0_16], %40 {strides = array<i32>} : memref<1x8x256xf32, #tpu.memory_space<vmem>>, vector<1x4x256xf32>,
    return
  }
  func.func @transform_0(%arg0: i32, %arg1: i32) -> (i32, i32, i32) {
    %c0_i32 = arith.constant 0 : i32
    %c0_i32_0 = arith.constant 0 : i32
    return %arg0, %c0_i32, %arg1 : i32, i32, i32
  }
  func.func @transform_1(%arg0: i32, %arg1: i32) -> (i32, i32, i32) {
    %c0_i32 = arith.constant 0 : i32
    %c0_i32_0 = arith.constant 0 : i32
    return %arg0, %c0_i32, %arg1 : i32, i32, i32
  }
  func.func @transform_2(%arg0: i32, %arg1: i32) -> (i32, i32) {
    %c0_i32 = arith.constant 0 : i32
    %c0_i32_0 = arith.constant 0 : i32
    %c0_i32_1 = arith.constant 0 : i32
    return %c0_i32, %c0_i32_0 : i32, i32
  }
  func.func @transform_3(%arg0: i32, %arg1: i32) -> (i32, i32) {
    %c0_i32 = arith.constant 0 : i32
    %c0_i32_0 = arith.constant 0 : i32
    %c0_i32_1 = arith.constant 0 : i32
    return %c0_i32, %c0_i32_0 : i32, i32
  }
  func.func @transform_4(%arg0: i32, %arg1: i32) -> (i32, i32, i32) {
    %c0_i32 = arith.constant 0 : i32
    %c0_i32_0 = arith.constant 0 : i32
    return %arg0, %c0_i32, %arg1 : i32, i32, i32
  }
}

</mosaic_0001>

<llo_original>
// kernel: tpu_custom_call.1
$region0: #{tpu_custom_call.1}
  #allocation0 [shape = 'u32[]', space=smem, size = 0x4, offset = 0x4, fixed_abs, tag = 'smem constant byte address 0x4 - core index']
  #allocation1 [shape = 'u32[72,128]{1,0:T(1,128)}', space=vmem, size = 0x9000, scoped, tag = 'internal scratch']
  %s0 = inlined_call_operand.hbm [shape: f32[2,8,256], index: 0, kind: input, shape index: {}]
  %s1 = inlined_call_operand.hbm [shape: f32[2,4,256], index: 1, kind: input, shape index: {}]
  %s2 = inlined_call_operand.vmem [shape: f32[4,4], index: 2, kind: input, shape index: {}]
  %s3 = inlined_call_operand.vmem [shape: f32[4,1], index: 3, kind: input, shape index: {}]
  %s4 = inlined_call_operand.hbm [shape: f32[2,8,256], index: 4, kind: output, shape index: {}]
  %s5 = sld [smem:[#allocation0]]
  $region57: #{tpu_custom_call.1} parent=0
    _
  %s7 = ssub.s32 1, %s5
  %s8 = scalar_select 0, %s7, %s5
  $region1: #{tpu_custom_call.1} parent=0
    #allocation2 [shape = 'u8[16384]{0}', space=vmem, size = 0x4000, scoped, tag = 'input window, operand 0']
    #allocation3 [shape = 's32[2]{0}', space=sflag, size = 0x8, scoped, tag = 'scoped memory for tpu_custom_call.1']
    #allocation4 [shape = 's32[2]{0}', space=sflag, size = 0x8, scoped, tag = 'scoped memory for tpu_custom_call.1']
    #allocation5 [shape = 'u8[8192]{0}', space=vmem, size = 0x2000, scoped, tag = 'input window, operand 1']
    #allocation6 [shape = 's32[2]{0}', space=sflag, size = 0x8, scoped, tag = 'scoped memory for tpu_custom_call.1']
    #allocation7 [shape = 'u8[16384]{0}', space=vmem, size = 0x4000, scoped, tag = 'output window, operand 0']
    %9 = vsyncpa [#allocation3], 0
    %s10 = scalar_lea.sflag [#allocation3], 1
    %11 = vsyncpa %s10, 0
    %12 = vsyncpa [#allocation6], 0
    %s13 = scalar_lea.sflag [#allocation6], 1
    %14 = vsyncpa %s13, 0
    %15 = vsyncpa [#allocation4], 0
    %s16 = scalar_lea.sflag [#allocation4], 1
    %17 = vsyncpa %s16, 0
    loop: start=0, step=1, limit=4
    $region2: #{tpu_custom_call.1} parent=1 // loop_pre_header
      _
    $region3: #{tpu_custom_call.1} parent=1 // loop_header
      %s19 = sphi 0, %s23
      %p20 = scmp.ge.s32.totalorder %s19, 4
      %s26 = sphi 0, %s38
      %s27 = sphi 0, %s34
      %s28 = sphi 0, %s26
      %s29 = sphi 0, %s27
      %s30 = sphi 0, %s28
      %s31 = sphi 0, %s29
      %s43 = sphi 0, %s45
      %s46 = sphi 0, %s43
      %s47 = sphi 0, %s46
      %s63 = sphi 0, %s47
      %s71 = sphi 0, %s73
      %s74 = sphi 0, %s71
      %s75 = sphi 0, %s74
      %s91 = sphi 0, %s75
      %s95 = sphi 0, %s95
      %s97 = sphi 0, %s95
      %s98 = sphi 0, %s97
      %s112 = sphi 0, %s98
      %s116 = sphi 0, %s116
      %s118 = sphi 0, %s116
      %s119 = sphi 0, %s118
      %s133 = sphi 0, %s119
      %s141 = sphi 0, %s143
      %s144 = sphi 0, %s141
      %s145 = sphi 0, %s144
      %s161 = sphi 0, %s145
    $region4: #{tpu_custom_call.1} parent=1 // loop_header_branch
      %22 = sbr.rel (%p20) target = $region8
    $region5: #{tpu_custom_call.1} parent=1 // loop_body
      %s24 = ssub.s32 %s19, 1
      %s25 = ssub.s32 %s19, 2
      %s32 = sadd.s32 1, %s27
      %p33 = scmp.ge.s32.totalorder %s32, 1
      %s34 = scalar_select %p33, 0, %s32
      %s35 = sadd.s32 1, %s26
      %s36 = scalar_select %p33, %s35, %s26
      %p37 = scmp.ge.s32.totalorder %s36, 2
      %s38 = scalar_select %p37, 0, %s36
      %s39 = ssub.s32 %s26, %s38
      %s40 = ssub.s32 %s27, %s34
      %s41 = sor.u32 %s39, %s40
      %p42 = scmp.eq.s32.totalorder %s41, 0
      %s44 = sadd.s32 %s43, 1
      %s45 = scalar_select %p42, %s43, %s44
      %p48 = pneg %p42
      %p49 = scmp.eq.s32.totalorder %s19, 1
      %p50 = por %p48, %p49
      %p51 = scmp.ne.s32.totalorder %s43, %s46
      %p52 = scmp.eq.s32.totalorder %s19, 0
      %p53 = por %p51, %p52
      %p54 = scmp.ne.s32.totalorder %s43, %s46
      %p55 = scmp.eq.s32.totalorder %s24, 1
      %p56 = por %p54, %p55
      %p57 = scmp.ne.s32.totalorder %s46, %s47
      %p58 = scmp.eq.s32.totalorder %s24, 0
      %p59 = por %p57, %p58
      %p60 = scmp.ne.s32.totalorder %s46, %s47
      %p61 = scmp.eq.s32.totalorder %s25, 1
      %p62 = por %p60, %p61
      %p64 = scmp.ne.s32.totalorder %s47, %s63
      %p65 = scmp.eq.s32.totalorder %s25, 0
      %p66 = por %p64, %p65
      %s67 = ssub.s32 %s26, %s38
      %s68 = ssub.s32 %s27, %s34
      %s69 = sor.u32 %s67, %s68
      %p70 = scmp.eq.s32.totalorder %s69, 0
      %s72 = sadd.s32 %s71, 1
      %s73 = scalar_select %p70, %s71, %s72
      %p76 = pneg %p70
      %p77 = scmp.eq.s32.totalorder %s19, 1
      %p78 = por %p76, %p77
      %p79 = scmp.ne.s32.totalorder %s71, %s74
      %p80 = scmp.eq.s32.totalorder %s19, 0
      %p81 = por %p79, %p80
      %p82 = scmp.ne.s32.totalorder %s71, %s74
      %p83 = scmp.eq.s32.totalorder %s24, 1
      %p84 = por %p82, %p83
      %p85 = scmp.ne.s32.totalorder %s74, %s75
      %p86 = scmp.eq.s32.totalorder %s24, 0
      %p87 = por %p85, %p86
      %p88 = scmp.ne.s32.totalorder %s74, %s75
      %p89 = scmp.eq.s32.totalorder %s25, 1
      %p90 = por %p88, %p89
      %p92 = scmp.ne.s32.totalorder %s75, %s91
      %p93 = scmp.eq.s32.totalorder %s25, 0
      %p94 = por %p92, %p93
      %s96 = sadd.s32 %s95, 1
      %p99 = scmp.eq.s32.totalorder %s19, 1
      %p100 = scmp.ne.s32.totalorder %s95, %s97
      %p101 = scmp.eq.s32.totalorder %s19, 0
      %p102 = por %p100, %p101
      %p103 = scmp.ne.s32.totalorder %s95, %s97
      %p104 = scmp.eq.s32.totalorder %s24, 1
      %p105 = por %p103, %p104
      %p106 = scmp.ne.s32.totalorder %s97, %s98
      %p107 = scmp.eq.s32.totalorder %s24, 0
      %p108 = por %p106, %p107
      %p109 = scmp.ne.s32.totalorder %s97, %s98
      %p110 = scmp.eq.s32.totalorder %s25, 1
      %p111 = por %p109, %p110
      %p113 = scmp.ne.s32.totalorder %s98, %s112
      %p114 = scmp.eq.s32.totalorder %s25, 0
      %p115 = por %p113, %p114
      %s117 = sadd.s32 %s116, 1
      %p120 = scmp.eq.s32.totalorder %s19, 1
      %p121 = scmp.ne.s32.totalorder %s116, %s118
      %p122 = scmp.eq.s32.totalorder %s19, 0
      %p123 = por %p121, %p122
      %p124 = scmp.ne.s32.totalorder %s116, %s118
      %p125 = scmp.eq.s32.totalorder %s24, 1
      %p126 = por %p124, %p125
      %p127 = scmp.ne.s32.totalorder %s118, %s119
      %p128 = scmp.eq.s32.totalorder %s24, 0
      %p129 = por %p127, %p128
      %p130 = scmp.ne.s32.totalorder %s118, %s119
      %p131 = scmp.eq.s32.totalorder %s25, 1
      %p132 = por %p130, %p131
      %p134 = scmp.ne.s32.totalorder %s119, %s133
      %p135 = scmp.eq.s32.totalorder %s25, 0
      %p136 = por %p134, %p135
      %s137 = ssub.s32 %s26, %s38
      %s138 = ssub.s32 %s27, %s34
      %s139 = sor.u32 %s137, %s138
      %p140 = scmp.eq.s32.totalorder %s139, 0
      %s142 = sadd.s32 %s141, 1
      %s143 = scalar_select %p140, %s141, %s142
      %p146 = pneg %p140
      %p147 = scmp.eq.s32.totalorder %s19, 1
      %p148 = por %p146, %p147
      %p149 = scmp.ne.s32.totalorder %s141, %s144
      %p150 = scmp.eq.s32.totalorder %s19, 0
      %p151 = por %p149, %p150
      %p152 = scmp.ne.s32.totalorder %s141, %s144
      %p153 = scmp.eq.s32.totalorder %s24, 1
      %p154 = por %p152, %p153
      %p155 = scmp.ne.s32.totalorder %s144, %s145
      %p156 = scmp.eq.s32.totalorder %s24, 0
      %p157 = por %p155, %p156
      %p158 = scmp.ne.s32.totalorder %s144, %s145
      %p159 = scmp.eq.s32.totalorder %s25, 1
      %p160 = por %p158, %p159
      %p162 = scmp.ne.s32.totalorder %s145, %s161
      %p163 = scmp.eq.s32.totalorder %s25, 0
      %p164 = por %p162, %p163
      %p165 = scmp.le.s32.totalorder 1, %s19
      %p166 = scmp.lt.s32.totalorder %s19, 3
      %p167 = pnand %p165, %p166
      %p168 = pneg %p167
      // Predicated region
      $region9: #{tpu_custom_call.1} parent=5 // pred_check
        _
      $region10: #{tpu_custom_call.1} parent=5 // pred_check_branch
        %170 = sbr.rel (%p167) target = $region12
      $region11: #{tpu_custom_call.1} parent=5 // pred_region
        %s171 = ssub.s32 %s19, 1
        // Predicated region
        $region13: #{tpu_custom_call.1} parent=11 // pred_check
          %p172 = pneg %p108
        $region14: #{tpu_custom_call.1} parent=11 // pred_check_branch
          %174 = sbr.rel (%p172) target = $region16
        $region15: #{tpu_custom_call.1} parent=11 // pred_region
          _
        $region16: #{tpu_custom_call.1} parent=11 // pred_fallthru
          _
        // Predicated region
        $region17: #{tpu_custom_call.1} parent=11 // pred_check
          %p175 = pneg %p129
        $region18: #{tpu_custom_call.1} parent=11 // pred_check_branch
          %177 = sbr.rel (%p175) target = $region20
        $region19: #{tpu_custom_call.1} parent=11 // pred_region
          _
        $region20: #{tpu_custom_call.1} parent=11 // pred_fallthru
          _
      $region12: #{tpu_custom_call.1} parent=5 // pred_fallthru
        _
      %p178 = scmp.lt.s32.totalorder %s19, 2
      // Predicated region
      $region21: #{tpu_custom_call.1} parent=5 // pred_check
        %p179 = pneg %p178
      $region22: #{tpu_custom_call.1} parent=5 // pred_check_branch
        %181 = sbr.rel (%p179) target = $region24
      $region23: #{tpu_custom_call.1} parent=5 // pred_region
        // Predicated region
        $region25: #{tpu_custom_call.1} parent=23 // pred_check
          %p182 = pneg %p53
        $region26: #{tpu_custom_call.1} parent=23 // pred_check_branch
          %184 = sbr.rel (%p182) target = $region28
        $region27: #{tpu_custom_call.1} parent=23 // pred_region
          %s185 = sand.u32 %s43, 1
          %s186 = scalar_lea.sflag [#allocation3], %s185
          %s187 = sand.u32 %s43, 1
          %s188 = smul.addr %s187, 16
          %s189 = scalar_lea.vmem [#allocation2], %s188
          %s190 = smul.u32 2, %s27
          %192 = vsyncadd %s186, 0
          %s193 = smul.addr %s26, 2
          %s194 = sadd.s32 %s190, %s193
          %s195 = smul.addr %s194, 8
          %s196 = scalar_lea.hbm %s0, %s195
          %s198 = sshll.u32 %s196, 4
          %s199 = int_to_ptr.hbm [resolvable:$true] %s198
          %s200 = sshll.u32 %s189, 4
          %s201 = int_to_ptr.vmem [resolvable:$true] %s200
          %203 = dma.hbm_to_vmem [thread:$0]  %s199, 256, %s201, %s186
        $region28: #{tpu_custom_call.1} parent=23 // pred_fallthru
          _
        // Predicated region
        $region29: #{tpu_custom_call.1} parent=23 // pred_check
          %p204 = pneg %p81
        $region30: #{tpu_custom_call.1} parent=23 // pred_check_branch
          %206 = sbr.rel (%p204) target = $region32
        $region31: #{tpu_custom_call.1} parent=23 // pred_region
          %s207 = sand.u32 %s71, 1
          %s208 = scalar_lea.sflag [#allocation6], %s207
          %s209 = sand.u32 %s71, 1
          %s210 = smul.addr %s209, 8
          %s211 = scalar_lea.vmem [#allocation5], %s210
          %s212 = smul.u32 2, %s27
          %214 = vsyncadd %s208, 0
          %s215 = smul.addr %s26, 2
          %s216 = sadd.s32 %s212, %s215
          %s217 = smul.addr %s216, 4
          %s218 = scalar_lea.hbm %s1, %s217
          %s220 = sshll.u32 %s218, 4
          %s221 = int_to_ptr.hbm [resolvable:$true] %s220
          %s222 = sshll.u32 %s211, 4
          %s223 = int_to_ptr.vmem [resolvable:$true] %s222
          %225 = dma.hbm_to_vmem [thread:$0]  %s221, 128, %s223, %s208
        $region32: #{tpu_custom_call.1} parent=23 // pred_fallthru
          _
      $region24: #{tpu_custom_call.1} parent=5 // pred_fallthru
        _
      %p226 = scmp.le.s32.totalorder 1, %s19
      %p227 = scmp.lt.s32.totalorder %s19, 3
      %p228 = pnand %p226, %p227
      %p229 = pneg %p228
      // Predicated region
      $region33: #{tpu_custom_call.1} parent=5 // pred_check
        _
      $region34: #{tpu_custom_call.1} parent=5 // pred_check_branch
        %231 = sbr.rel (%p228) target = $region36
      $region35: #{tpu_custom_call.1} parent=5 // pred_region
        %s232 = ssub.s32 %s19, 1
        %s233 = sand.u32 %s46, 1
        %s234 = scalar_lea.sflag [#allocation3], %s233
        %s235 = sand.u32 %s46, 1
        %s236 = smul.addr %s235, 16
        %s237 = scalar_lea.vmem [#allocation2], %s236
        // Predicated region
        $region37: #{tpu_custom_call.1} parent=35 // pred_check
          %p238 = pneg %p59
        $region38: #{tpu_custom_call.1} parent=35 // pred_check_branch
          %240 = sbr.rel (%p238) target = $region40
        $region39: #{tpu_custom_call.1} parent=35 // pred_region
          %242 = dma.done %s234, 256
        $region40: #{tpu_custom_call.1} parent=35 // pred_fallthru
          _
        %s243 = sand.u32 %s74, 1
        %s244 = scalar_lea.sflag [#allocation6], %s243
        %s245 = sand.u32 %s74, 1
        %s246 = smul.addr %s245, 8
        %s247 = scalar_lea.vmem [#allocation5], %s246
        // Predicated region
        $region41: #{tpu_custom_call.1} parent=35 // pred_check
          %p248 = pneg %p87
        $region42: #{tpu_custom_call.1} parent=35 // pred_check_branch
          %250 = sbr.rel (%p248) target = $region44
        $region43: #{tpu_custom_call.1} parent=35 // pred_region
          %252 = dma.done %s244, 128
        $region44: #{tpu_custom_call.1} parent=35 // pred_fallthru
          _
        %s253 = sand.u32 %s46, 1
        %s254 = scalar_lea.sflag [#allocation3], %s253
        %s255 = sand.u32 %s46, 1
        %s256 = smul.addr %s255, 16
        %s257 = scalar_lea.vmem [#allocation2], %s256
        %p258 = pneg %p59
        %p259 = pneg %p56
        %s260 = sand.u32 %s74, 1
        %s261 = scalar_lea.sflag [#allocation6], %s260
        %s262 = sand.u32 %s74, 1
        %s263 = smul.addr %s262, 8
        %s264 = scalar_lea.vmem [#allocation5], %s263
        %p265 = pneg %p87
        %p266 = pneg %p84
        %p267 = pneg %p108
        %p268 = pneg %p105
        %p269 = pneg %p129
        %p270 = pneg %p126
        %p271 = pneg %p157
        %p272 = pneg %p154
        %s273 = sand.u32 %s144, 1
        %s274 = scalar_lea.sflag [#allocation4], %s273
        %s275 = sand.u32 %s144, 1
        %s276 = smul.addr %s275, 16
        %s277 = scalar_lea.vmem [#allocation7], %s276
        %s278 = smul.u32 2, %s29
        %s279 = smul.u32 2, %s29
        %s280 = smul.u32 2, %s29
        %v281 = vld [vmem:[%s247] sm:$0xff]
        %v282 = vld [vmem:[%s2] sm:$0xf]
        %v283 = vld [vmem:[%s3] sm:$0xf]
        %285 = vset.pattern.permute.xlu0 0
        %286 = vperm.xlu0 %285, %v282
        %v287 = vpop.permute.xlu0 %286
        %v290 = vperm.slane %v281, 0
        %v291 = vperm.slane %v281, 4
        %v294 = vperm.slane %v290, 0
        %v295 = vperm.slane %v291, 0
        %v296 = vmul.f32 %v287, %v294
        %v297 = vmul.f32 %v287, %v295
        %299 = vset.pattern.permute.xlu0 0
        %300 = vperm.xlu0 %299, %v283
        %v301 = vpop.permute.xlu0 %300
        %v303 = vadd.f32 %v301, %v296
        %v304 = vadd.f32 %v301, %v297
        %305 = vset.pattern.permute.xlu0 1
        %306 = vperm.xlu0 %305, %v282
        %v307 = vpop.permute.xlu0 %306
        %v309 = vperm.slane %v281, 1
        %v310 = vperm.slane %v281, 5
        %v313 = vperm.slane %v309, 1
        %v314 = vperm.slane %v310, 1
        %v315 = vmul.f32 %v307, %v313
        %v316 = vmul.f32 %v307, %v314
        %v317 = vadd.f32 %v303, %v315
        %v318 = vadd.f32 %v304, %v316
        %319 = vset.pattern.permute.xlu0 2
        %320 = vperm.xlu0 %319, %v282
        %v321 = vpop.permute.xlu0 %320
        %v323 = vperm.slane %v281, 2
        %v324 = vperm.slane %v281, 6
        %v327 = vperm.slane %v323, 2
        %v328 = vperm.slane %v324, 2
        %v329 = vmul.f32 %v321, %v327
        %v330 = vmul.f32 %v321, %v328
        %v331 = vadd.f32 %v317, %v329
        %v332 = vadd.f32 %v318, %v330
        %333 = vset.pattern.permute.xlu0 3
        %334 = vperm.xlu0 %333, %v282
        %v335 = vpop.permute.xlu0 %334
        %v337 = vperm.slane %v281, 3
        %v338 = vperm.slane %v281, 7
        %v341 = vperm.slane %v337, 3
        %v342 = vperm.slane %v338, 3
        %v343 = vmul.f32 %v335, %v341
        %v344 = vmul.f32 %v335, %v342
        %v345 = vadd.f32 %v331, %v343
        %v346 = vadd.f32 %v332, %v344
        %v347 = vld [vmem:[%s237] sm:$0xf]
        %v348 = vld [vmem:[%s237 + $0x8] sm:$0xf]
        %349 = vst [vmem:[#allocation1] ss:$2 sm:$0xff] %v281
        %v350 = vld.sshfl [vmem:[#allocation1] sm:$0xff pattern:$0x75316420]
        %v351 = vld.sshfl [vmem:[#allocation1 + $0x8] sm:$0xff pattern:$0x75316420]
        %v354 = vadd.f32 %v347, %v350
        %v355 = vadd.f32 %v348, %v351
        %356 = vst [vmem:[%s277] sm:$0xf] %v354
        %357 = vst [vmem:[%s277 + $0x8] sm:$0xf] %v355
        %v358 = vld [vmem:[%s237] sm:$0xf0]
        %v359 = vld [vmem:[%s237 + $0x8] sm:$0xf0]
        %v362 = vrot.slane %v345, 4
        %v363 = vrot.slane %v346, 4
        %v366 = vadd.f32 %v358, %v362
        %v367 = vadd.f32 %v359, %v363
        %368 = vst [vmem:[%s277] sm:$0xf0] %v366
        %369 = vst [vmem:[%s277 + $0x8] sm:$0xf0] %v367
        %s370 = sand.u32 %s144, 1
        %s371 = scalar_lea.sflag [#allocation4], %s370
        %s372 = sand.u32 %s144, 1
        %s373 = smul.addr %s372, 16
        %s374 = scalar_lea.vmem [#allocation7], %s373
        // Predicated region
        $region45: #{tpu_custom_call.1} parent=35 // pred_check
          %p375 = pneg %p154
        $region46: #{tpu_custom_call.1} parent=35 // pred_check_branch
          %377 = sbr.rel (%p375) target = $region48
        $region47: #{tpu_custom_call.1} parent=35 // pred_region
          %s378 = smul.u32 2, %s29
          %380 = vsyncadd %s371, 0
          %s381 = smul.addr %s28, 2
          %s382 = sadd.s32 %s378, %s381
          %s383 = smul.addr %s382, 8
          %s384 = scalar_lea.hbm %s4, %s383
          %s386 = sshll.u32 %s374, 4
          %s387 = int_to_ptr.vmem [resolvable:$true] %s386
          %s388 = sshll.u32 %s384, 4
          %s389 = int_to_ptr.hbm [resolvable:$true] %s388
          %391 = dma.vmem_to_hbm [thread:$0]  %s387, 256, %s389, %s371
        $region48: #{tpu_custom_call.1} parent=35 // pred_fallthru
          _
      $region36: #{tpu_custom_call.1} parent=5 // pred_fallthru
        _
      %p392 = scmp.le.s32.totalorder 2, %s19
      // Predicated region
      $region49: #{tpu_custom_call.1} parent=5 // pred_check
        %p393 = pneg %p392
      $region50: #{tpu_custom_call.1} parent=5 // pred_check_branch
        %395 = sbr.rel (%p393) target = $region52
      $region51: #{tpu_custom_call.1} parent=5 // pred_region
        %s396 = ssub.s32 %s19, 2
        // Predicated region
        $region53: #{tpu_custom_call.1} parent=51 // pred_check
          %p397 = pneg %p160
        $region54: #{tpu_custom_call.1} parent=51 // pred_check_branch
          %399 = sbr.rel (%p397) target = $region56
        $region55: #{tpu_custom_call.1} parent=51 // pred_region
          %s400 = sand.u32 %s145, 1
          %s401 = scalar_lea.sflag [#allocation4], %s400
          %s402 = sand.u32 %s145, 1
          %s403 = smul.addr %s402, 16
          %s404 = scalar_lea.vmem [#allocation7], %s403
          %406 = dma.done %s401, 256
        $region56: #{tpu_custom_call.1} parent=51 // pred_fallthru
          _
      $region52: #{tpu_custom_call.1} parent=5 // pred_fallthru
        _
    $region6: #{tpu_custom_call.1} parent=1 // loop_footer
      %s23 = sadd.s32 1, %s19
    $region7: #{tpu_custom_call.1} parent=1 // loop_footer_branch
      %18 = sbr.rel target = $region3
    $region8: #{tpu_custom_call.1} parent=1 // loop_exit
      _
    %407 = vsyncpa [#allocation3], 1
    %s408 = scalar_lea.sflag [#allocation3], 1
    %409 = vsyncpa %s408, 1
    %410 = vsyncpa [#allocation6], 1
    %s411 = scalar_lea.sflag [#allocation6], 1
    %412 = vsyncpa %s411, 1
    %413 = vsyncpa [#allocation4], 1
    %s414 = scalar_lea.sflag [#allocation4], 1
    %415 = vsyncpa %s414, 1

</llo_original>
